<compile_context>
chip_gen: v6e
topology: v6e:2x2x1
jax: 0.10.0
libtpu: 0.0.40
codegen_flags: <defaults>
</compile_context>

<pallas_src>
import jax
import jax.numpy as jnp
from jax import lax
from jax.experimental import pallas as pl
from jax.experimental.pallas import tpu as pltpu

BN_EPS = 1e-5
LANE = 128


def _residual_block_kernel(x_ref, w_ref, b_ref, g_ref, bt_ref, o_ref):
    # One grid step = one full ResidualBlock instance (whole batch resident in VMEM):
    # 2 matmuls on the MXU, BN reductions on the XLU, scale/shift + ReLU on the VPU,
    # rsqrt on the EUP.
    x = x_ref[...].astype(jnp.float32)       # (N, Hp)
    w = w_ref[...].astype(jnp.float32)       # (Hp, Hp), PyTorch (out, in) layout
    b = b_ref[...].astype(jnp.float32)       # (1, Hp)
    gamma = g_ref[...].astype(jnp.float32)   # (1, Hp)
    beta = bt_ref[...].astype(jnp.float32)   # (1, Hp)

    inv_n = jnp.float32(1.0 / x.shape[0])

    def linear(v):
        # v @ w.T without materializing a transpose: contract dim 1 of both operands.
        return lax.dot_general(v, w, (((1,), (1,)), ((), ())),
                               preferred_element_type=jnp.float32) + b

    def batchnorm(v):
        # Training-mode BN (batch stats, biased variance), folded into a single
        # per-feature scale/shift so the per-element cost is one mul + one add.
        # One-pass stats: var = E[v^2] - mean^2 (saves an (N, Hp) subtraction).
        mean = jnp.sum(v, axis=0, keepdims=True) * inv_n
        mean_sq = jnp.sum(v * v, axis=0, keepdims=True) * inv_n
        var = jnp.maximum(mean_sq - mean * mean, 0.0)
        scale = gamma * lax.rsqrt(var + BN_EPS)     # (1, Hp)
        shift = beta - mean * scale                 # (1, Hp)
        return v * scale + shift

    out = jnp.maximum(batchnorm(linear(x)), 0.0)    # fc -> bn -> relu
    out = jnp.maximum(linear(out), 0.0)             # fc -> relu
    out = batchnorm(out)                            # bn
    o_ref[...] = jnp.maximum(out + x, 0.0).astype(o_ref.dtype)   # +residual -> relu


def _pad_last(a, target):
    pad = target - a.shape[-1]
    if pad == 0:
        return a
    return jnp.pad(a, [(0, 0)] * (a.ndim - 1) + [(0, pad)])


@jax.jit
def residual_block_many(x, weight, bias, gamma, beta):
    """B independent ResidualBlock instances in one pallas_call.

    x: (B, N, H); weight: (B, H, H) in PyTorch (out, in) layout;
    bias/gamma/beta: (B, H). Returns (B, N, H).
    """
    bnum, n, h = x.shape
    hp = max(LANE, ((h + LANE - 1) // LANE) * LANE)   # lane-dense feature width

    # Zero-pad features: padded columns carry w=0, bias=0, gamma=0, beta=0 so they stay
    # exactly 0 through BN (var=0 -> scale=gamma*rsqrt(eps)=0, shift=0), ReLU, residual.
    x_p = _pad_last(x, hp)
    w_p = _pad_last(jnp.pad(weight, ((0, 0), (0, hp - h), (0, 0))), hp)
    b_p = _pad_last(bias, hp).reshape(bnum, 1, hp)
    g_p = _pad_last(gamma, hp).reshape(bnum, 1, hp)
    be_p = _pad_last(beta, hp).reshape(bnum, 1, hp)

    spec = lambda shape: pl.BlockSpec((None,) + shape, lambda i: (i, 0, 0))

    out_p = pl.pallas_call(
        _residual_block_kernel,
        out_shape=jax.ShapeDtypeStruct((bnum, n, hp), x.dtype),
        grid=(bnum,),
        in_specs=[
            spec((n, hp)),    # x
            spec((hp, hp)),   # weight (PyTorch (out, in))
            spec((1, hp)),    # bias
            spec((1, hp)),    # gamma
            spec((1, hp)),    # beta
        ],
        out_specs=spec((n, hp)),
        compiler_params=pltpu.CompilerParams(
            dimension_semantics=("parallel",)),
    )(x_p, w_p, b_p, g_p, be_p)
    return out_p[..., :h]


@jax.jit
def residual_block(x, weight, bias, gamma, beta):
    """Single ResidualBlock forward. x: (N, H); weight: PyTorch-style (out, in)."""
    return residual_block_many(x[None], weight[None], bias[None],
                               gamma[None], beta[None])[0]


def _reference(x, weight, bias, gamma, beta):
    # Pure-JAX reference mirroring the PyTorch forward (training-mode BN).
    def bn(v):
        mean = jnp.mean(v, axis=0, keepdims=True)
        var = jnp.mean((v - mean) ** 2, axis=0, keepdims=True)
        return gamma * (v - mean) / jnp.sqrt(var + BN_EPS) + beta

    out = x @ weight.T + bias
    out = jax.nn.relu(bn(out))
    out = out @ weight.T + bias
    out = jax.nn.relu(out)
    out = bn(out)
    out = out + x
    return jax.nn.relu(out)


if __name__ == "__main__":
    hidden_size = 32
    batch = 8

    key = jax.random.PRNGKey(0)
    kx, kw, kb = jax.random.split(key, 3)

    x = jax.random.normal(kx, (batch, hidden_size), dtype=jnp.float32)

    # PyTorch Linear default init: U(-1/sqrt(H), 1/sqrt(H)); BN init gamma=1, beta=0.
    bound = 1.0 / (hidden_size ** 0.5)
    weight = jax.random.uniform(kw, (hidden_size, hidden_size),
                                minval=-bound, maxval=bound, dtype=jnp.float32)
    bias = jax.random.uniform(kb, (hidden_size,),
                              minval=-bound, maxval=bound, dtype=jnp.float32)
    gamma = jnp.ones((hidden_size,), dtype=jnp.float32)
    beta = jnp.zeros((hidden_size,), dtype=jnp.float32)

    # Single-instance path (matches the PyTorch module).
    out = residual_block(x, weight, bias, gamma, beta)
    out = jax.block_until_ready(out)
    ref = _reference(x, weight, bias, gamma, beta)
    assert out.shape == (batch, hidden_size)
    assert jnp.allclose(out, ref, atol=1e-5, rtol=1e-5), "mismatch vs reference"

    # Batched-instance path (grid axis): 3 independent blocks in one launch.
    bnum = 3
    kxs, kws, kbs = jax.random.split(jax.random.PRNGKey(1), 3)
    xs = jax.random.normal(kxs, (bnum, batch, hidden_size), dtype=jnp.float32)
    ws = jax.random.uniform(kws, (bnum, hidden_size, hidden_size),
                            minval=-bound, maxval=bound, dtype=jnp.float32)
    bs = jax.random.uniform(kbs, (bnum, hidden_size),
                            minval=-bound, maxval=bound, dtype=jnp.float32)
    gs = jnp.ones((bnum, hidden_size), dtype=jnp.float32)
    bts = jnp.zeros((bnum, hidden_size), dtype=jnp.float32)
    outs = jax.block_until_ready(residual_block_many(xs, ws, bs, gs, bts))
    refs = jnp.stack([_reference(xs[i], ws[i], bs[i], gs[i], bts[i])
                      for i in range(bnum)])
    assert jnp.allclose(outs, refs, atol=1e-5, rtol=1e-5), "batched mismatch"

    # TODO(synk): `downsample` is None at default construction; residual is a passthrough.
    print("KERNEL_OK")
</pallas_src>

<mosaic_0001>
module attributes {stable_mosaic.version = 11 : i64} {
  func.func @_residual_block_kernel(%arg0: i32, %arg1: memref<1x8x128xf32, #tpu.memory_space<vmem>>, %arg2: memref<1x128x128xf32, #tpu.memory_space<vmem>>, %arg3: memref<1x1x128xf32, #tpu.memory_space<vmem>>, %arg4: memref<1x1x128xf32, #tpu.memory_space<vmem>>, %arg5: memref<1x1x128xf32, #tpu.memory_space<vmem>>, %arg6: memref<1x8x128xf32, #tpu.memory_space<vmem>>) attributes {dimension_semantics = [#tpu.dimension_semantics<parallel>], iteration_bounds = array<i64: 1>, scalar_prefetch = 0 : i64, scratch_operands = 0 : i64, tpu.core_type = #tpu.core_type<tc>, window_params = [{transform_indices = @transform_0, window_bounds = array<i64: 1, 8, 128>}, {transform_indices = @transform_1, window_bounds = array<i64: 1, 128, 128>}, {transform_indices = @transform_2, window_bounds = array<i64: 1, 1, 128>}, {transform_indices = @transform_3, window_bounds = array<i64: 1, 1, 128>}, {transform_indices = @transform_4, window_bounds = array<i64: 1, 1, 128>}, {transform_indices = @transform_5, window_bounds = array<i64: 1, 8, 128>}]} {
    %c0 = arith.constant 0 : index
    %c0_0 = arith.constant 0 : index
    %c0_1 = arith.constant 0 : index
    %0 = vector.load %arg1[%c0, %c0_0, %c0_1] : memref<1x8x128xf32, #tpu.memory_space<vmem>>, vector<1x8x128xf32>
    %1 = vector.shape_cast %0 : vector<1x8x128xf32> to vector<8x128xf32>
    %c0_2 = arith.constant 0 : index
    %c0_3 = arith.constant 0 : index
    %c0_4 = arith.constant 0 : index
    %2 = vector.load %arg2[%c0_2, %c0_3, %c0_4] : memref<1x128x128xf32, #tpu.memory_space<vmem>>, vector<1x128x128xf32>
    %3 = vector.shape_cast %2 : vector<1x128x128xf32> to vector<128x128xf32>
    %c0_5 = arith.constant 0 : index
    %c0_6 = arith.constant 0 : index
    %c0_7 = arith.constant 0 : index
    %4 = vector.load %arg3[%c0_5, %c0_6, %c0_7] : memref<1x1x128xf32, #tpu.memory_space<vmem>>, vector<1x1x128xf32>
    %5 = vector.shape_cast %4 : vector<1x1x128xf32> to vector<1x128xf32>
    %c0_8 = arith.constant 0 : index
    %c0_9 = arith.constant 0 : index
    %c0_10 = arith.constant 0 : index
    %6 = vector.load %arg4[%c0_8, %c0_9, %c0_10] : memref<1x1x128xf32, #tpu.memory_space<vmem>>, vector<1x1x128xf32>
    %7 = vector.shape_cast %6 : vector<1x1x128xf32> to vector<1x128xf32>
    %c0_11 = arith.constant 0 : index
    %c0_12 = arith.constant 0 : index
    %c0_13 = arith.constant 0 : index
    %8 = vector.load %arg5[%c0_11, %c0_12, %c0_13] : memref<1x1x128xf32, #tpu.memory_space<vmem>>, vector<1x1x128xf32>
    %9 = vector.shape_cast %8 : vector<1x1x128xf32> to vector<1x128xf32>
    %cst = arith.constant dense<0.000000e+00> : vector<8x128xf32>
    %10 = tpu.matmul %1, %3, %cst {dimension_numbers = #tpu.dot_dimension_numbers<[1], [1], [0], [0], [0, 0, 1, 0], [], []>} : vector<8x128xf32>, vector<128x128xf32>, vector<8x128xf32> -> vector<8x128xf32>
    %11 = vector.broadcast %5 : vector<1x128xf32> to vector<8x128xf32>
    %12 = arith.addf %10, %11 : vector<8x128xf32>
    %cst_14 = arith.constant dense<0.000000e+00> : vector<128xf32>
    %13 = vector.multi_reduction <add>, %12, %cst_14 [0] : vector<8x128xf32> to vector<128xf32>
    %14 = vector.shape_cast %13 : vector<128xf32> to vector<1x128xf32>
    %cst_15 = arith.constant 1.250000e-01 : f32
    %15 = vector.broadcast %cst_15 : f32 to vector<1x128xf32>
    %16 = arith.mulf %14, %15 : vector<1x128xf32>
    %17 = arith.mulf %12, %12 : vector<8x128xf32>
    %cst_16 = arith.constant dense<0.000000e+00> : vector<128xf32>
    %18 = vector.multi_reduction <add>, %17, %cst_16 [0] : vector<8x128xf32> to vector<128xf32>
    %19 = vector.shape_cast %18 : vector<128xf32> to vector<1x128xf32>
    %cst_17 = arith.constant 1.250000e-01 : f32
    %20 = vector.broadcast %cst_17 : f32 to vector<1x128xf32>
    %21 = arith.mulf %19, %20 : vector<1x128xf32>
    %22 = arith.mulf %16, %16 : vector<1x128xf32>
    %23 = arith.subf %21, %22 : vector<1x128xf32>
    %cst_18 = arith.constant 0.000000e+00 : f32
    %24 = vector.broadcast %cst_18 : f32 to vector<1x128xf32>
    %25 = arith.maximumf %23, %24 : vector<1x128xf32>
    %cst_19 = arith.constant 9.99999974E-6 : f32
    %26 = vector.broadcast %cst_19 : f32 to vector<1x128xf32>
    %27 = arith.addf %25, %26 : vector<1x128xf32>
    %28 = math.rsqrt %27 : vector<1x128xf32>
    %29 = arith.mulf %7, %28 : vector<1x128xf32>
    %30 = arith.mulf %16, %29 : vector<1x128xf32>
    %31 = arith.subf %9, %30 : vector<1x128xf32>
    %32 = vector.broadcast %29 : vector<1x128xf32> to vector<8x128xf32>
    %33 = arith.mulf %12, %32 : vector<8x128xf32>
    %34 = vector.broadcast %31 : vector<1x128xf32> to vector<8x128xf32>
    %35 = arith.addf %33, %34 : vector<8x128xf32>
    %cst_20 = arith.constant 0.000000e+00 : f32
    %36 = vector.broadcast %cst_20 : f32 to vector<8x128xf32>
    %37 = arith.maximumf %35, %36 : vector<8x128xf32>
    %cst_21 = arith.constant dense<0.000000e+00> : vector<8x128xf32>
    %38 = tpu.matmul %37, %3, %cst_21 {dimension_numbers = #tpu.dot_dimension_numbers<[1], [1], [0], [0], [0, 0, 1, 0], [], []>} : vector<8x128xf32>, vector<128x128xf32>, vector<8x128xf32> -> vector<8x128xf32>
    %39 = vector.broadcast %5 : vector<1x128xf32> to vector<8x128xf32>
    %40 = arith.addf %38, %39 : vector<8x128xf32>
    %cst_22 = arith.constant 0.000000e+00 : f32
    %41 = vector.broadcast %cst_22 : f32 to vector<8x128xf32>
    %42 = arith.maximumf %40, %41 : vector<8x128xf32>
    %cst_23 = arith.constant dense<0.000000e+00> : vector<128xf32>
    %43 = vector.multi_reduction <add>, %42, %cst_23 [0] : vector<8x128xf32> to vector<128xf32>
    %44 = vector.shape_cast %43 : vector<128xf32> to vector<1x128xf32>
    %cst_24 = arith.constant 1.250000e-01 : f32
    %45 = vector.broadcast %cst_24 : f32 to vector<1x128xf32>
    %46 = arith.mulf %44, %45 : vector<1x128xf32>
    %47 = arith.mulf %42, %42 : vector<8x128xf32>
    %cst_25 = arith.constant dense<0.000000e+00> : vector<128xf32>
    %48 = vector.multi_reduction <add>, %47, %cst_25 [0] : vector<8x128xf32> to vector<128xf32>
    %49 = vector.shape_cast %48 : vector<128xf32> to vector<1x128xf32>
    %cst_26 = arith.constant 1.250000e-01 : f32
    %50 = vector.broadcast %cst_26 : f32 to vector<1x128xf32>
    %51 = arith.mulf %49, %50 : vector<1x128xf32>
    %52 = arith.mulf %46, %46 : vector<1x128xf32>
    %53 = arith.subf %51, %52 : vector<1x128xf32>
    %cst_27 = arith.constant 0.000000e+00 : f32
    %54 = vector.broadcast %cst_27 : f32 to vector<1x128xf32>
    %55 = arith.maximumf %53, %54 : vector<1x128xf32>
    %cst_28 = arith.constant 9.99999974E-6 : f32
    %56 = vector.broadcast %cst_28 : f32 to vector<1x128xf32>
    %57 = arith.addf %55, %56 : vector<1x128xf32>
    %58 = math.rsqrt %57 : vector<1x128xf32>
    %59 = arith.mulf %7, %58 : vector<1x128xf32>
    %60 = arith.mulf %46, %59 : vector<1x128xf32>
    %61 = arith.subf %9, %60 : vector<1x128xf32>
    %62 = vector.broadcast %59 : vector<1x128xf32> to vector<8x128xf32>
    %63 = arith.mulf %42, %62 : vector<8x128xf32>
    %64 = vector.broadcast %61 : vector<1x128xf32> to vector<8x128xf32>
    %65 = arith.addf %63, %64 : vector<8x128xf32>
    %66 = arith.addf %65, %1 : vector<8x128xf32>
    %cst_29 = arith.constant 0.000000e+00 : f32
    %67 = vector.broadcast %cst_29 : f32 to vector<8x128xf32>
    %68 = arith.maximumf %66, %67 : vector<8x128xf32>
    %c0_30 = arith.constant 0 : index
    %c0_31 = arith.constant 0 : index
    %c0_32 = arith.constant 0 : index
    %69 = vector.load %arg6[%c0_30, %c0_31, %c0_32] : memref<1x8x128xf32, #tpu.memory_space<vmem>>, vector<1x8x128xf32>
    %70 = vector.shape_cast %69 : vector<1x8x128xf32> to vector<8x128xf32>
    %71 = vector.shape_cast %68 : vector<8x128xf32> to vector<1x8x128xf32>
    tpu.vector_store %arg6[%c0_30, %c0_31, %c0_32], %71 {strides = array<i32>} : memref<1x8x128xf32, #tpu.memory_space<vmem>>, vector<1x8x128xf32>,
    return
  }
  func.func @transform_0(%arg0: i32) -> (i32, i32, i32) {
    %c0_i32 = arith.constant 0 : i32
    %c0_i32_0 = arith.constant 0 : i32
    %c0_i32_1 = arith.constant 0 : i32
    return %arg0, %c0_i32, %c0_i32_0 : i32, i32, i32
  }
  func.func @transform_1(%arg0: i32) -> (i32, i32, i32) {
    %c0_i32 = arith.constant 0 : i32
    %c0_i32_0 = arith.constant 0 : i32
    %c0_i32_1 = arith.constant 0 : i32
    return %arg0, %c0_i32, %c0_i32_0 : i32, i32, i32
  }
  func.func @transform_2(%arg0: i32) -> (i32, i32, i32) {
    %c0_i32 = arith.constant 0 : i32
    %c0_i32_0 = arith.constant 0 : i32
    %c0_i32_1 = arith.constant 0 : i32
    return %arg0, %c0_i32, %c0_i32_0 : i32, i32, i32
  }
  func.func @transform_3(%arg0: i32) -> (i32, i32, i32) {
    %c0_i32 = arith.constant 0 : i32
    %c0_i32_0 = arith.constant 0 : i32
    %c0_i32_1 = arith.constant 0 : i32
    return %arg0, %c0_i32, %c0_i32_0 : i32, i32, i32
  }
  func.func @transform_4(%arg0: i32) -> (i32, i32, i32) {
    %c0_i32 = arith.constant 0 : i32
    %c0_i32_0 = arith.constant 0 : i32
    %c0_i32_1 = arith.constant 0 : i32
    return %arg0, %c0_i32, %c0_i32_0 : i32, i32, i32
  }
  func.func @transform_5(%arg0: i32) -> (i32, i32, i32) {
    %c0_i32 = arith.constant 0 : i32
    %c0_i32_0 = arith.constant 0 : i32
    %c0_i32_1 = arith.constant 0 : i32
    return %arg0, %c0_i32, %c0_i32_0 : i32, i32, i32
  }
}

</mosaic_0001>

<llo_original>
// kernel: residual_block_many.1
$region0: #{residual_block_many.1}
  #allocation0 [shape = 'u32[]', space=smem, size = 0x4, offset = 0x4, fixed_abs, tag = 'smem constant byte address 0x4 - core index']
  #allocation1 [shape = 'u32[144,128]{1,0:T(1,128)}', space=vmem, size = 0x12000, scoped, tag = 'internal scratch']
  %s0 = inlined_call_operand.vmem [shape: f32[1,8,128], index: 0, kind: input, shape index: {}]
  %s1 = inlined_call_operand.vmem [shape: f32[1,128,128], index: 1, kind: input, shape index: {}]
  %s2 = inlined_call_operand.vmem [shape: f32[1,1,128], index: 2, kind: input, shape index: {}]
  %s3 = inlined_call_operand.vmem [shape: f32[1,1,128], index: 3, kind: input, shape index: {}]
  %s4 = inlined_call_operand.vmem [shape: f32[1,1,128], index: 4, kind: input, shape index: {}]
  %s5 = inlined_call_operand.hbm [shape: f32[1,8,128], index: 5, kind: output, shape index: {}]
  %s6 = sld [smem:[#allocation0]]
  $region30: #{residual_block_many.1} parent=0
    _
  %s8 = ssub.s32 1, %s6
  %s9 = scalar_select 0, %s8, %s6
  $region1: #{residual_block_many.1} parent=0
    #allocation2 [shape = 'u8[4096]{0}', space=vmem, size = 0x1000, scoped, tag = 'output window, operand 0, single buffered']
    #allocation3 [shape = 's32[1]{0}', space=sflag, size = 0x4, scoped, tag = 'scoped memory for residual_block_many.1']
    %10 = vsyncpa [#allocation3], 0
    // Predicated region
    $region2: #{residual_block_many.1} parent=1 // pred_check
      _
    $region3: #{residual_block_many.1} parent=1 // pred_check_branch
      %12 = sbr.rel (0) target = $region5
    $region4: #{residual_block_many.1} parent=1 // pred_region
      _
    $region5: #{residual_block_many.1} parent=1 // pred_fallthru
      _
    // Predicated region
    $region6: #{residual_block_many.1} parent=1 // pred_check
      _
    $region7: #{residual_block_many.1} parent=1 // pred_check_branch
      %14 = sbr.rel (0) target = $region9
    $region8: #{residual_block_many.1} parent=1 // pred_region
      _
    $region9: #{residual_block_many.1} parent=1 // pred_fallthru
      _
    // Predicated region
    $region10: #{residual_block_many.1} parent=1 // pred_check
      _
    $region11: #{residual_block_many.1} parent=1 // pred_check_branch
      %16 = sbr.rel (0) target = $region13
    $region12: #{residual_block_many.1} parent=1 // pred_region
      _
    $region13: #{residual_block_many.1} parent=1 // pred_fallthru
      _
    // Predicated region
    $region14: #{residual_block_many.1} parent=1 // pred_check
      _
    $region15: #{residual_block_many.1} parent=1 // pred_check_branch
      %18 = sbr.rel (0) target = $region17
    $region16: #{residual_block_many.1} parent=1 // pred_region
      _
    $region17: #{residual_block_many.1} parent=1 // pred_fallthru
      _
    // Predicated region
    $region18: #{residual_block_many.1} parent=1 // pred_check
      _
    $region19: #{residual_block_many.1} parent=1 // pred_check_branch
      %20 = sbr.rel (0) target = $region21
    $region20: #{residual_block_many.1} parent=1 // pred_region
      _
    $region21: #{residual_block_many.1} parent=1 // pred_fallthru
      _
    %v21 = vld [vmem:[%s0] sm:$0xff]
    %v22 = vld [vmem:[%s1] sm:$0xff]
    %v23 = vld [vmem:[%s1 + $0x8] sm:$0xff]
    %v24 = vld [vmem:[%s1 + $0x10] sm:$0xff]
    %v25 = vld [vmem:[%s1 + $0x18] sm:$0xff]
    %v26 = vld [vmem:[%s1 + $0x20] sm:$0xff]
    %v27 = vld [vmem:[%s1 + $0x28] sm:$0xff]
    %v28 = vld [vmem:[%s1 + $0x30] sm:$0xff]
    %v29 = vld [vmem:[%s1 + $0x38] sm:$0xff]
    %v30 = vld [vmem:[%s1 + $0x40] sm:$0xff]
    %v31 = vld [vmem:[%s1 + $0x48] sm:$0xff]
    %v32 = vld [vmem:[%s1 + $0x50] sm:$0xff]
    %v33 = vld [vmem:[%s1 + $0x58] sm:$0xff]
    %v34 = vld [vmem:[%s1 + $0x60] sm:$0xff]
    %v35 = vld [vmem:[%s1 + $0x68] sm:$0xff]
    %v36 = vld [vmem:[%s1 + $0x70] sm:$0xff]
    %v37 = vld [vmem:[%s1 + $0x78] sm:$0xff]
    %v38 = vld [vmem:[%s2] sm:$0x1]
    %v39 = vld [vmem:[%s3] sm:$0x1]
    %v40 = vld [vmem:[%s4] sm:$0x1]
    %v42 = vlaneseq
    %v43 = vshrl.u32 %v42, 7
    %v44 = vsub.s32 0, %v43
    %v45 = vrot.slane %v38, %v44
    %47 = vmatprep.subr.mxu0 0.0
    %48 = vmatpush1.xpose.msra.mxu0 %v37
    %49 = vmatprep.subr.mxu0 0.0
    %50 = vmatpush1.xpose.msra.mxu0 %v36
    %51 = vmatprep.subr.mxu0 0.0
    %52 = vmatpush1.xpose.msra.mxu0 %v35
    %53 = vmatprep.subr.mxu0 0.0
    %54 = vmatpush1.xpose.msra.mxu0 %v34
    %55 = vmatprep.subr.mxu0 0.0
    %56 = vmatpush1.xpose.msra.mxu0 %v33
    %57 = vmatprep.subr.mxu0 0.0
    %58 = vmatpush1.xpose.msra.mxu0 %v32
    %59 = vmatprep.subr.mxu0 0.0
    %60 = vmatpush1.xpose.msra.mxu0 %v31
    %61 = vmatprep.subr.mxu0 0.0
    %62 = vmatpush1.xpose.msra.mxu0 %v30
    %63 = vmatprep.subr.mxu0 0.0
    %64 = vmatpush1.xpose.msra.mxu0 %v29
    %65 = vmatprep.subr.mxu0 0.0
    %66 = vmatpush1.xpose.msra.mxu0 %v28
    %67 = vmatprep.subr.mxu0 0.0
    %68 = vmatpush1.xpose.msra.mxu0 %v27
    %69 = vmatprep.subr.mxu0 0.0
    %70 = vmatpush1.xpose.msra.mxu0 %v26
    %71 = vmatprep.subr.mxu0 0.0
    %72 = vmatpush1.xpose.msra.mxu0 %v25
    %73 = vmatprep.subr.mxu0 0.0
    %74 = vmatpush1.xpose.msra.mxu0 %v24
    %75 = vmatprep.subr.mxu0 0.0
    %76 = vmatpush1.xpose.msra.mxu0 %v23
    %77 = vmatprep.subr.mxu0 0.0
    %78 = vmatpush1.xpose.msra.mxu0 %v22
    %79 = vmatprep.subr.mxu0 0.0
    %80 = vmatpush2.xpose.msra.mxu0 0.0
    %81 = vmatprep.subr.mxu0 0.0
    %82 = vmatpush2.xpose.msra.mxu0 0.0
    %83 = vmatprep.subr.mxu0 0.0
    %84 = vmatpush2.xpose.msra.mxu0 0.0
    %85 = vmatprep.subr.mxu0 0.0
    %86 = vmatpush2.xpose.msra.mxu0 0.0
    %87 = vmatprep.subr.mxu0 0.0
    %88 = vmatpush2.xpose.msra.mxu0 0.0
    %89 = vmatprep.subr.mxu0 0.0
    %90 = vmatpush2.xpose.msra.mxu0 0.0
    %91 = vmatprep.subr.mxu0 0.0
    %92 = vmatpush2.xpose.msra.mxu0 0.0
    %93 = vmatprep.subr.mxu0 0.0
    %94 = vmatpush2.xpose.msra.mxu0 0.0
    %95 = vmatprep.subr.mxu0 0.0
    %96 = vmatpush2.xpose.msra.mxu0 0.0
    %97 = vmatprep.subr.mxu0 0.0
    %98 = vmatpush2.xpose.msra.mxu0 0.0
    %99 = vmatprep.subr.mxu0 0.0
    %100 = vmatpush2.xpose.msra.mxu0 0.0
    %101 = vmatprep.subr.mxu0 0.0
    %102 = vmatpush2.xpose.msra.mxu0 0.0
    %103 = vmatprep.subr.mxu0 0.0
    %104 = vmatpush2.xpose.msra.mxu0 0.0
    %105 = vmatprep.subr.mxu0 0.0
    %106 = vmatpush2.xpose.msra.mxu0 0.0
    %107 = vmatprep.subr.mxu0 0.0
    %108 = vmatpush2.xpose.msra.mxu0 0.0
    %109 = vmatprep.subr.mxu0 0.0
    %110 = vmatpush2.xpose.msra.mxu0 0.0
    %111 = vmatprep.mubr.f32.mxu0 0.0
    %112 = vmatmul.mubr.f32.gmra.mxu0 %v21
    %v113 = vpop.f32.mrf.mxu0
    %v114 = vadd.f32 %v45, %v113
    %v115 = vpop.f32.mrf.mxu0
    %116 = vdwg.mxu0
    %v117 = vrot.slane %v114, 4
    %v118 = vadd.f32 %v114, %v117
    %v119 = vrot.slane %v118, 2
    %v120 = vadd.f32 %v118, %v119
    %v121 = vrot.slane %v120, 1
    %v122 = vadd.f32 %v120, %v121
    %v123 = vmul.f32 %v122, 0.125
    %v124 = vmul.f32 %v114, %v114
    %v125 = vrot.slane %v124, 4
    %v126 = vadd.f32 %v124, %v125
    %v127 = vrot.slane %v126, 2
    %v128 = vadd.f32 %v126, %v127
    %v129 = vrot.slane %v128, 1
    %v130 = vadd.f32 %v128, %v129
    %v131 = vmul.f32 %v130, 0.125
    %v132 = vmul.f32 %v123, %v123
    %v133 = vsub.f32 %v131, %v132
    %v134 = vmax.f32 %v133, 0.0
    %v135 = vadd.f32 %v134, 1e-05
    %v136 = vrsqrt.pop %v135
    %v137 = vmul.f32 %v39, %v136
    %v138 = vmul.f32 %v123, %v137
    %v139 = vsub.f32 %v40, %v138
    %v141 = vlaneseq
    %v142 = vshrl.u32 %v141, 7
    %v143 = vsub.s32 0, %v142
    %v144 = vrot.slane %v137, %v143
    %v146 = vmul.f32 %v114, %v144
    %v148 = vlaneseq
    %v149 = vshrl.u32 %v148, 7
    %v150 = vsub.s32 0, %v149
    %v151 = vrot.slane %v139, %v150
    %v153 = vadd.f32 %v146, %v151
    %v154 = vmax.f32 %v153, 0.0
    %155 = vmatprep.subr.mxu0 0.0
    %156 = vmatpush1.xpose.msra.mxu0 %v37
    %157 = vmatprep.subr.mxu0 0.0
    %158 = vmatpush1.xpose.msra.mxu0 %v36
    %159 = vmatprep.subr.mxu0 0.0
    %160 = vmatpush1.xpose.msra.mxu0 %v35
    %161 = vmatprep.subr.mxu0 0.0
    %162 = vmatpush1.xpose.msra.mxu0 %v34
    %163 = vmatprep.subr.mxu0 0.0
    %164 = vmatpush1.xpose.msra.mxu0 %v33
    %165 = vmatprep.subr.mxu0 0.0
    %166 = vmatpush1.xpose.msra.mxu0 %v32
    %167 = vmatprep.subr.mxu0 0.0
    %168 = vmatpush1.xpose.msra.mxu0 %v31
    %169 = vmatprep.subr.mxu0 0.0
    %170 = vmatpush1.xpose.msra.mxu0 %v30
    %171 = vmatprep.subr.mxu0 0.0
    %172 = vmatpush1.xpose.msra.mxu0 %v29
    %173 = vmatprep.subr.mxu0 0.0
    %174 = vmatpush1.xpose.msra.mxu0 %v28
    %175 = vmatprep.subr.mxu0 0.0
    %176 = vmatpush1.xpose.msra.mxu0 %v27
    %177 = vmatprep.subr.mxu0 0.0
    %178 = vmatpush1.xpose.msra.mxu0 %v26
    %179 = vmatprep.subr.mxu0 0.0
    %180 = vmatpush1.xpose.msra.mxu0 %v25
    %181 = vmatprep.subr.mxu0 0.0
    %182 = vmatpush1.xpose.msra.mxu0 %v24
    %183 = vmatprep.subr.mxu0 0.0
    %184 = vmatpush1.xpose.msra.mxu0 %v23
    %185 = vmatprep.subr.mxu0 0.0
    %186 = vmatpush1.xpose.msra.mxu0 %v22
    %187 = vmatprep.subr.mxu0 0.0
    %188 = vmatpush2.xpose.msra.mxu0 0.0
    %189 = vmatprep.subr.mxu0 0.0
    %190 = vmatpush2.xpose.msra.mxu0 0.0
    %191 = vmatprep.subr.mxu0 0.0
    %192 = vmatpush2.xpose.msra.mxu0 0.0
    %193 = vmatprep.subr.mxu0 0.0
    %194 = vmatpush2.xpose.msra.mxu0 0.0
    %195 = vmatprep.subr.mxu0 0.0
    %196 = vmatpush2.xpose.msra.mxu0 0.0
    %197 = vmatprep.subr.mxu0 0.0
    %198 = vmatpush2.xpose.msra.mxu0 0.0
    %199 = vmatprep.subr.mxu0 0.0
    %200 = vmatpush2.xpose.msra.mxu0 0.0
    %201 = vmatprep.subr.mxu0 0.0
    %202 = vmatpush2.xpose.msra.mxu0 0.0
    %203 = vmatprep.subr.mxu0 0.0
    %204 = vmatpush2.xpose.msra.mxu0 0.0
    %205 = vmatprep.subr.mxu0 0.0
    %206 = vmatpush2.xpose.msra.mxu0 0.0
    %207 = vmatprep.subr.mxu0 0.0
    %208 = vmatpush2.xpose.msra.mxu0 0.0
    %209 = vmatprep.subr.mxu0 0.0
    %210 = vmatpush2.xpose.msra.mxu0 0.0
    %211 = vmatprep.subr.mxu0 0.0
    %212 = vmatpush2.xpose.msra.mxu0 0.0
    %213 = vmatprep.subr.mxu0 0.0
    %214 = vmatpush2.xpose.msra.mxu0 0.0
    %215 = vmatprep.subr.mxu0 0.0
    %216 = vmatpush2.xpose.msra.mxu0 0.0
    %217 = vmatprep.subr.mxu0 0.0
    %218 = vmatpush2.xpose.msra.mxu0 0.0
    %219 = vmatprep.mubr.f32.mxu0 0.0
    %220 = vmatmul.mubr.f32.gmra.mxu0 %v154
    %v221 = vpop.f32.mrf.mxu0
    %v222 = vadd.f32 %v45, %v221
    %v223 = vpop.f32.mrf.mxu0
    %224 = vdwg.mxu0
    %v225 = vmax.f32 %v222, 0.0
    %v226 = vrot.slane %v225, 4
    %v227 = vadd.f32 %v225, %v226
    %v228 = vrot.slane %v227, 2
    %v229 = vadd.f32 %v227, %v228
    %v230 = vrot.slane %v229, 1
    %v231 = vadd.f32 %v229, %v230
    %v232 = vmul.f32 %v231, 0.125
    %v233 = vmul.f32 %v225, %v225
    %v234 = vrot.slane %v233, 4
    %v235 = vadd.f32 %v233, %v234
    %v236 = vrot.slane %v235, 2
    %v237 = vadd.f32 %v235, %v236
    %v238 = vrot.slane %v237, 1
    %v239 = vadd.f32 %v237, %v238
    %v240 = vmul.f32 %v239, 0.125
    %v241 = vmul.f32 %v232, %v232
    %v242 = vsub.f32 %v240, %v241
    %v243 = vmax.f32 %v242, 0.0
    %v244 = vadd.f32 %v243, 1e-05
    %v245 = vrsqrt.pop %v244
    %v246 = vmul.f32 %v39, %v245
    %v247 = vmul.f32 %v232, %v246
    %v248 = vsub.f32 %v40, %v247
    %v250 = vlaneseq
    %v251 = vshrl.u32 %v250, 7
    %v252 = vsub.s32 0, %v251
    %v253 = vrot.slane %v246, %v252
    %v255 = vmul.f32 %v225, %v253
    %v257 = vlaneseq
    %v258 = vshrl.u32 %v257, 7
    %v259 = vsub.s32 0, %v258
    %v260 = vrot.slane %v248, %v259
    %v262 = vadd.f32 %v255, %v260
    %v263 = vadd.f32 %v262, %v21
    %v264 = vmax.f32 %v263, 0.0
    %265 = vst [vmem:[#allocation2] sm:$0xff] %v264
    // Predicated region
    $region22: #{residual_block_many.1} parent=1 // pred_check
      _
    $region23: #{residual_block_many.1} parent=1 // pred_check_branch
      %267 = sbr.rel (0) target = $region25
    $region24: #{residual_block_many.1} parent=1 // pred_region
      %s269 = ssub.s32 128, 128
      %270 = vsyncadd [#allocation3], %s269
      %s272 = sshll.u32 [#allocation2], 4
      %s273 = int_to_ptr.vmem [resolvable:$true] %s272
      %275 = dma.vmem_to_hbm [thread:$0]  %s273, 128, %s5, [#allocation3]
    $region25: #{residual_block_many.1} parent=1 // pred_fallthru
      _
    // Predicated region
    $region26: #{residual_block_many.1} parent=1 // pred_check
      _
    $region27: #{residual_block_many.1} parent=1 // pred_check_branch
      %277 = sbr.rel (0) target = $region29
    $region28: #{residual_block_many.1} parent=1 // pred_region
      %278 = dma.done [#allocation3], 128
    $region29: #{residual_block_many.1} parent=1 // pred_fallthru
      _
    %279 = vsyncpa [#allocation3], 1

</llo_original>
